<compile_context>
chip_gen: v7x
topology: tpu7x:2x2x1
jax: 0.10.0
libtpu: 0.0.40
codegen_flags: <defaults>
</compile_context>

<pallas_src>
import functools

import jax
import jax.numpy as jnp
import numpy as np
from jax.experimental import pallas as pl
from jax.experimental.pallas import tpu as pltpu


# --------------------------------------------------------------------------
# pltpu.roll direction guard: tiny probe that checks whether pltpu.roll uses
# np.roll's convention (shift moves data toward higher indices).  The fused
# kernel's tap shifts are chosen accordingly, so correctness never depends on
# the (undocumented) sign convention.
# --------------------------------------------------------------------------
def _roll_matches_numpy() -> bool:
    def k(x_ref, o_ref):
        o_ref[...] = pltpu.roll(x_ref[...], 1, axis=1)

    x = np.zeros((8, 128), np.float32)
    x[0, 5] = 1.0
    y = np.asarray(
        pl.pallas_call(k, out_shape=jax.ShapeDtypeStruct((8, 128), jnp.float32))(
            jnp.asarray(x)))
    if y[0, 6] == 1.0:
        return True
    if y[0, 4] == 1.0:
        return False
    raise RuntimeError("could not determine pltpu.roll direction")


# --------------------------------------------------------------------------
# Fused RDB kernel
# --------------------------------------------------------------------------
def _rdb5c_kernel(nf, gc, Wp, L, roll_forward,
                  x_ref, mask_ref,
                  w1, b1, w2, b2, w3, b3, w4, b4, w5, b5,
                  out_ref, feat_ref, taps_ref):
    f32, bf16 = jnp.float32, jnp.bfloat16
    mask = mask_ref[...]                                   # (1, L) interior mask

    # Growth-buffer invariant (load-bearing): rows 0:nf hold the host
    # zero-padded input, and every later row is written through `mask`, so
    # the pad ring / lane tail of every row read below is exactly zero.
    # That is what implements the convolutions' zero padding.
    feat_ref[0:nf, :] = x_ref[0].astype(f32)

    def shifted(x, delta):
        # shifted(x, d)[:, p] == x[:, p + d] for in-range p + d.  Wrapped
        # positions only ever land on masked pad-ring / lane-tail lanes.
        if delta == 0:
            return x
        shift = (-delta) % L if roll_forward else delta % L
        return pltpu.roll(x, shift, axis=1)                # XLU lane rotation

    def conv3x3(cin, w_ref, b_ref):
        # One kernel row (dy) at a time: stage the 3 dx-taps into the fixed
        # VMEM chunk and accumulate a K = 3*cin bf16 dot_general in f32.
        x = feat_ref[0:cin, :]                             # (cin, L) f32
        acc = None
        for r in range(3):                                 # dy = r - 1
            row = shifted(x, (r - 1) * Wp)                 # chained rolls: shifts in {1, Wp}
            taps_ref[0:cin, :] = shifted(row, -1)          # dx = -1
            taps_ref[cin:2 * cin, :] = row                 # dx =  0
            taps_ref[2 * cin:3 * cin, :] = shifted(row, +1)  # dx = +1
            part = jax.lax.dot_general(                    # bf16 MXU, f32 accumulate
                w_ref[r], taps_ref[0:3 * cin, :].astype(bf16),
                dimension_numbers=(((1,), (0,)), ((), ())),
                preferred_element_type=f32)
            acc = part if acc is None else acc + part
        return acc + b_ref[...]                            # bias (cout, 1) f32

    def hardswish(v):                                      # VPU math stays f32
        return v * jnp.clip(v + 3.0, 0.0, 6.0) * (1.0 / 6.0)

    for i, (w_ref, b_ref) in enumerate([(w1, b1), (w2, b2), (w3, b3), (w4, b4)]):
        cin = nf + i * gc
        y = hardswish(conv3x3(cin, w_ref, b_ref))
        feat_ref[cin:cin + gc, :] = y * mask               # keep pad ring / tail zero

    y5 = conv3x3(nf + 4 * gc, w5, b5)
    out = (y5 * 0.2 + feat_ref[0:nf, :]) * mask            # residual; layout self-maintaining
    out_ref[0] = out.astype(out_ref.dtype)


# --------------------------------------------------------------------------
# Host-side helpers
# --------------------------------------------------------------------------
def prepare_rdb5c_params(params, matmul_dtype=jnp.bfloat16):
    """(3,3,Cin,Cout) HWIO -> per-row (3, Cout, 3*Cin) in matmul dtype."""
    ws, bs = [], []
    for i in range(1, 6):
        w = params[f"w{i}"]
        ky, kx, cin, cout = w.shape
        # w_row[r][co, dx*cin + ci] == w[r, dx, ci, co]  -> matches the staged
        # tap ordering [dx=-1 block | dx=0 block | dx=+1 block] in the kernel.
        w = jnp.transpose(w, (0, 3, 1, 2)).reshape(ky, cout, kx * cin)
        ws.append(w.astype(matmul_dtype))
        bs.append(params[f"b{i}"].reshape(-1, 1).astype(jnp.float32))
    return ws, bs


def _interior_mask(H, W, M):
    Hp, Wp = H + 2, W + 2
    hw = Hp * Wp
    rows = np.arange(Hp)[:, None]
    cols = np.arange(Wp)[None, :]
    m2d = (rows >= 1) & (rows <= H) & (cols >= 1) & (cols <= W)
    m = np.zeros((1, M), np.float32)
    m[0, :hw] = m2d.reshape(-1).astype(np.float32)
    return jnp.asarray(m)


def _pick_batch_fold(N, M, max_lanes=4096):
    """Largest divisor of N whose folded lane width stays modest."""
    best = 1
    for d in range(1, N + 1):
        if N % d == 0 and d * M <= max(max_lanes, M):
            best = d
    return best


def _vmem_limit_bytes(nf, gc, L, weight_bytes):
    c_total = nf + 4 * gc
    feat = c_total * L * 4                      # f32 growth buffer
    taps = 3 * c_total * L * (4 + 2)            # f32 staging chunk + bf16 dot temp
    io = 2 * (nf * L * 4) * 2                   # double-buffered input + output blocks
    misc = 2 * L * 4 + (2 << 20)                # mask + headroom
    need = feat + taps + io + misc + 2 * weight_bytes
    return int(min(max(int(need * 1.4), 32 << 20), 64 << 20))   # cap: v7x physical VMEM


def rdb5c_apply_flat(x_flat, mask, ws, bs, *, nf, gc, Wp,
                     roll_forward=True, out_dtype=None):
    """Run the fused RDB on padded-flat activations.

    x_flat: (G, nf, L) with L = B_tile * M; pad ring and lane tails must be
    zero.  Returns (G, nf, L) with the same invariant, so chained RDB/RRDB
    blocks can stay in this layout end-to-end (no host pad/crop passes).
    """
    G, nf_in, L = x_flat.shape
    assert nf_in == nf and L % 128 == 0
    out_dtype = out_dtype or x_flat.dtype
    c_total = nf + 4 * gc

    kernel = functools.partial(_rdb5c_kernel, nf, gc, Wp, L, roll_forward)

    in_specs = [pl.BlockSpec((1, nf, L), lambda g: (g, 0, 0)),
                pl.BlockSpec((1, L), lambda g: (0, 0))]
    args = [x_flat, mask]
    for w, b in zip(ws, bs):
        in_specs.append(pl.BlockSpec(w.shape, lambda g: (0, 0, 0)))
        in_specs.append(pl.BlockSpec(b.shape, lambda g: (0, 0)))
        args.extend([w, b])

    weight_bytes = sum(int(np.prod(w.shape)) * w.dtype.itemsize +
                       int(np.prod(b.shape)) * 4 for w, b in zip(ws, bs))

    return pl.pallas_call(
        kernel,
        out_shape=jax.ShapeDtypeStruct((G, nf, L), out_dtype),
        grid=(G,),
        in_specs=in_specs,
        out_specs=pl.BlockSpec((1, nf, L), lambda g: (g, 0, 0)),
        scratch_shapes=[
            pltpu.VMEM((c_total, L), jnp.float32),        # dense-growth buffer
            pltpu.VMEM((3 * c_total, L), jnp.float32),    # per-row tap staging chunk
        ],
        compiler_params=pltpu.CompilerParams(
            dimension_semantics=("parallel",),            # batch across v7x's 2 TCs
            vmem_limit_bytes=_vmem_limit_bytes(nf, gc, L, weight_bytes)),
    )(*args)


def rdb5c_forward(x_nchw, params, *, roll_forward=True, batch_fold=None):
    """ResidualDenseBlock_5C forward.  Input/output NCHW (like PyTorch)."""
    N, nf, H, W = x_nchw.shape
    gc = params["w1"].shape[-1]
    assert nf % 8 == 0 and gc % 8 == 0, "channel counts must be multiples of 8"
    Hp, Wp = H + 2, W + 2
    hw = Hp * Wp
    M = pl.cdiv(hw, 128) * 128                 # lane-dense flat spatial length / image

    B_tile = batch_fold if batch_fold is not None else _pick_batch_fold(N, M)
    assert N % B_tile == 0
    G, L = N // B_tile, B_tile * M

    # Single spatial zero-pad, channels-major flat layout, fold B_tile images
    # per grid step: (G, nf, B_tile*M).
    xp = jnp.pad(x_nchw, ((0, 0), (0, 0), (1, 1), (1, 1))).reshape(N, nf, hw)
    xp = jnp.pad(xp, ((0, 0), (0, 0), (0, M - hw)))
    xp = xp.reshape(G, B_tile, nf, M).transpose(0, 2, 1, 3).reshape(G, nf, L)

    mask = jnp.tile(_interior_mask(H, W, M), (1, B_tile))  # (1, L)

    ws, bs = prepare_rdb5c_params(params)
    out_flat = rdb5c_apply_flat(xp, mask, ws, bs, nf=nf, gc=gc, Wp=Wp,
                                roll_forward=roll_forward,
                                out_dtype=x_nchw.dtype)

    out = out_flat.reshape(G, nf, B_tile, M).transpose(0, 2, 1, 3).reshape(N, nf, M)
    out = out[:, :, :hw].reshape(N, nf, Hp, Wp)
    return out[:, :, 1:H + 1, 1:W + 1]


# --------------------------------------------------------------------------
# Synthetic parameters (HWIO weights, 1-D biases)
# --------------------------------------------------------------------------
def init_params(key, nf, gc):
    cins = [nf, nf + gc, nf + 2 * gc, nf + 3 * gc, nf + 4 * gc]
    couts = [gc, gc, gc, gc, nf]
    params = {}
    for i, (ci, co) in enumerate(zip(cins, couts), start=1):
        key, kw, kb = jax.random.split(key, 3)
        params[f"w{i}"] = 0.05 * jax.random.normal(kw, (3, 3, ci, co), jnp.float32)
        params[f"b{i}"] = 0.05 * jax.random.normal(kb, (co,), jnp.float32)
    return params


# ---------------- pure-JAX reference (for correctness check) ----------------
def _ref_conv(x_nhwc, w, b):
    y = jax.lax.conv_general_dilated(
        x_nhwc, w, window_strides=(1, 1), padding="SAME",
        dimension_numbers=("NHWC", "HWIO", "NHWC"))
    return y + b[None, None, None, :]


def _hardswish(x):
    return x * jnp.clip(x + 3.0, 0.0, 6.0) / 6.0


def rdb5c_reference(x_nchw, p):
    x = jnp.transpose(x_nchw, (0, 2, 3, 1))
    x1 = _hardswish(_ref_conv(x, p["w1"], p["b1"]))
    x2 = _hardswish(_ref_conv(jnp.concatenate([x, x1], -1), p["w2"], p["b2"]))
    x3 = _hardswish(_ref_conv(jnp.concatenate([x, x1, x2], -1), p["w3"], p["b3"]))
    x4 = _hardswish(_ref_conv(jnp.concatenate([x, x1, x2, x3], -1), p["w4"], p["b4"]))
    x5 = _ref_conv(jnp.concatenate([x, x1, x2, x3, x4], -1), p["w5"], p["b5"])
    return jnp.transpose(x5 * 0.2 + x, (0, 3, 1, 2))


if __name__ == "__main__":
    # Small shapes consistent with the module: nf=16, gc=8, batch=2, 16x16.
    N, NF, GC, H, W = 2, 16, 8, 16, 16

    key = jax.random.PRNGKey(0)
    key, kx = jax.random.split(key)
    x = jax.random.normal(kx, (N, NF, H, W), jnp.float32)   # NCHW like PyTorch
    params = init_params(key, NF, GC)

    roll_fwd = _roll_matches_numpy()
    fwd = jax.jit(functools.partial(rdb5c_forward, roll_forward=roll_fwd))

    out = jax.block_until_ready(fwd(x, params))
    assert out.shape == (N, NF, H, W)

    ref = jax.block_until_ready(rdb5c_reference(x, params))
    # bf16 matmul operands with f32 accumulate -> tolerance looser than the
    # pure-f32 check of v1 (residual path x stays exact, only 0.2*x5 differs).
    np.testing.assert_allclose(np.asarray(out), np.asarray(ref),
                               rtol=3e-2, atol=3e-2)

    print("KERNEL_OK")
</pallas_src>

<mosaic_0001>
module attributes {stable_mosaic.version = 11 : i64} {
  func.func @k(%arg0: memref<8x128xf32, #tpu.memory_space<vmem>>, %arg1: memref<8x128xf32, #tpu.memory_space<vmem>>) attributes {dimension_semantics = [], scalar_prefetch = 0 : i64, scratch_operands = 0 : i64, tpu.core_type = #tpu.core_type<tc>} {
    %c0 = arith.constant 0 : index
    %c0_0 = arith.constant 0 : index
    %0 = vector.load %arg0[%c0, %c0_0] : memref<8x128xf32, #tpu.memory_space<vmem>>, vector<8x128xf32>
    %c1_i32 = arith.constant 1 : i32
    %1 = tpu.dynamic_rotate %0 by %c1_i32 dim 1 : vector<8x128xf32>, i32 -> vector<8x128xf32>
    %c0_1 = arith.constant 0 : index
    %c0_2 = arith.constant 0 : index
    %2 = vector.load %arg1[%c0_1, %c0_2] : memref<8x128xf32, #tpu.memory_space<vmem>>, vector<8x128xf32>
    tpu.vector_store %arg1[%c0_1, %c0_2], %1 {strides = array<i32>} : memref<8x128xf32, #tpu.memory_space<vmem>>, vector<8x128xf32>,
    return
  }
}

</mosaic_0001>

<llo_original>
// kernel: tpu_custom_call.1
$region0: #{tpu_custom_call.1}
  #allocation0 [shape = 'u32[]', space=smem, size = 0x4, offset = 0x4, fixed_abs, tag = 'smem constant byte address 0x4 - core index']
  #allocation1 [shape = 'u32[144,128]{1,0:T(1,128)}', space=vmem, size = 0x12000, scoped, tag = 'internal scratch']
  %s0 = inlined_call_operand.hbm [shape: f32[8,128], index: 0, kind: input, shape index: {}]
  %s1 = inlined_call_operand.hbm [shape: f32[8,128], index: 1, kind: output, shape index: {}]
  %s2 = sld [smem:[#allocation0]]
  $region18: #{tpu_custom_call.1} parent=0
    _
  %s4 = ssub.s32 1, %s2
  %s5 = scalar_select 0, %s4, %s2
  $region1: #{tpu_custom_call.1} parent=0
    #allocation2 [shape = 'u8[4096]{0}', space=vmem, size = 0x1000, scoped, tag = 'input window, operand 0, single buffered']
    #allocation3 [shape = 's32[1]{0}', space=sflag, size = 0x4, scoped, tag = 'scoped memory for tpu_custom_call.1']
    #allocation4 [shape = 's32[1]{0}', space=sflag, size = 0x4, scoped, tag = 'scoped memory for tpu_custom_call.1']
    #allocation5 [shape = 'u8[4096]{0}', space=vmem, size = 0x1000, scoped, tag = 'output window, operand 0, single buffered']
    %6 = vsyncpa [#allocation3], 0
    %7 = vsyncpa [#allocation4], 0
    // Predicated region
    $region2: #{tpu_custom_call.1} parent=1 // pred_check
      _
    $region3: #{tpu_custom_call.1} parent=1 // pred_check_branch
      %9 = sbr.rel (0) target = $region5
    $region4: #{tpu_custom_call.1} parent=1 // pred_region
      %s11 = ssub.s32 128, 128
      %12 = vsyncadd [#allocation3], %s11
      %s14 = sshll.u32 [#allocation2], 4
      %s15 = int_to_ptr.vmem [resolvable:$true] %s14
      %17 = dma.hbm_to_vmem [thread:$0]  %s0, 128, %s15, [#allocation3]
    $region5: #{tpu_custom_call.1} parent=1 // pred_fallthru
      _
    // Predicated region
    $region6: #{tpu_custom_call.1} parent=1 // pred_check
      _
    $region7: #{tpu_custom_call.1} parent=1 // pred_check_branch
      %19 = sbr.rel (0) target = $region9
    $region8: #{tpu_custom_call.1} parent=1 // pred_region
      %20 = dma.done [#allocation3], 128
    $region9: #{tpu_custom_call.1} parent=1 // pred_fallthru
      _
    %v21 = vld [vmem:[#allocation2] sm:$0xff]
    %22 = vrot.lane.b32.xlu0 %v21, 1
    %v23 = vpop.permute.xlu0 %22
    %24 = vst [vmem:[#allocation5] sm:$0xff] %v23
    // Predicated region
    $region10: #{tpu_custom_call.1} parent=1 // pred_check
      _
    $region11: #{tpu_custom_call.1} parent=1 // pred_check_branch
      %26 = sbr.rel (0) target = $region13
    $region12: #{tpu_custom_call.1} parent=1 // pred_region
      %s28 = ssub.s32 128, 128
      %29 = vsyncadd [#allocation4], %s28
      %s31 = sshll.u32 [#allocation5], 4
      %s32 = int_to_ptr.vmem [resolvable:$true] %s31
      %34 = dma.vmem_to_hbm [thread:$0]  %s32, 128, %s1, [#allocation4]
    $region13: #{tpu_custom_call.1} parent=1 // pred_fallthru
      _
    // Predicated region
    $region14: #{tpu_custom_call.1} parent=1 // pred_check
      _
    $region15: #{tpu_custom_call.1} parent=1 // pred_check_branch
      %36 = sbr.rel (0) target = $region17
    $region16: #{tpu_custom_call.1} parent=1 // pred_region
      %37 = dma.done [#allocation4], 128
    $region17: #{tpu_custom_call.1} parent=1 // pred_fallthru
      _
    %38 = vsyncpa [#allocation3], 1
    %39 = vsyncpa [#allocation4], 1

</llo_original>
